<compile_context>
chip_gen: v7x
topology: tpu7x:2x2x1
jax: 0.10.0
libtpu: 0.0.40
codegen_flags: <defaults>
</compile_context>

<pallas_src>
import math
import numpy as np
import jax
import jax.numpy as jnp
from jax import lax
from jax.experimental import pallas as pl
from jax.experimental.pallas import tpu as pltpu


# ----------------------------------------------------------------------------
# helpers
# ----------------------------------------------------------------------------
def _round_up(v, m):
    return ((v + m - 1) // m) * m


def _is_multicore_chip():
    # v7x has 2 TensorCores per chip; v5e/v6e have 1 (the grid is a serial loop).
    try:
        kind = jax.devices()[0].device_kind.lower()
    except Exception:
        return False
    return "v7" in kind


def _choose_block_batch(B, L, D, *, multicore):
    """Sequences per grid step.  Blocks are as large as comfortably fits VMEM
    (amortizes the ~0.35us per-grid-step overhead on this HBM-bound kernel);
    the grid is only forced to >=2 steps on multi-TensorCore chips (v7x)."""
    target_rows = 4096
    max_block_bytes = (10 if multicore else 12) * 1024 * 1024     # f32 x block
    bb = max(1, min(B, target_rows // max(L, 1)))
    while bb > 1 and bb * L * D * 4 > max_block_bytes:
        bb -= 1
    if multicore:
        while bb > 1 and pl.cdiv(B, bb) < 2:
            bb -= 1
    # Rows per block must be sublane(8)-aligned unless a single block covers
    # the whole (B*L) row extent (full-dim blocks may be unaligned).
    if bb < B and (bb * L) % 8 != 0:
        g = 8 // math.gcd(L, 8)
        bb = min(B, _round_up(bb, g))
    return min(bb, B)


# ----------------------------------------------------------------------------
# Pallas kernel: fused emission computation, BB sequences per grid step.
# ----------------------------------------------------------------------------
def get_emissions(x, params):
    """x: (B, L, D) f32  ->  emissions (B, L, 2) f32."""
    B, L, D = x.shape
    multicore = _is_multicore_chip()
    BB = _choose_block_batch(B, L, D, multicore=multicore)
    nb = pl.cdiv(B, BB)
    N = BB * L                                   # rows per grid step

    # Host-side prep.  x is only reshaped (free, contiguous): no pad / no cast
    # pass over the big tensor.  Weights are tiny and prepped once per call.
    x2 = x.reshape(B * L, D)
    w1t = params["w1"].T.astype(jnp.bfloat16)                              # (D,32)
    b1 = params["b1"].reshape(1, 32).astype(jnp.float32)
    wc_all = jnp.transpose(params["wc"], (2, 1, 0)).astype(jnp.bfloat16)   # (3,32,16)
    bc = params["bc"].reshape(1, 16).astype(jnp.float32)
    # liner2 padded to 8 sublanes: full unmasked sublane stores, lane-dense
    # (8, N) output tile; rows 2..7 are zero and sliced off below.
    w2p = jnp.zeros((8, 16), jnp.bfloat16).at[:2].set(params["w2"].astype(jnp.bfloat16))
    b2p = jnp.zeros((8, 1), jnp.float32).at[:2, 0].set(params["b2"].astype(jnp.float32))

    def kernel(x_ref, w1_ref, b1_ref, wc_ref, bc_ref, w2_ref, b2_ref, out_ref):
        # liner1: bf16 operands on the MXU, f32 accumulate; bias stays f32.
        # TODO(synk): F.dropout treated as identity (inference semantics); the
        # training-mode RNG dropout mask is not reproduced.
        xb = x_ref[...].astype(jnp.bfloat16)
        h1 = jnp.dot(xb, w1_ref[...],
                     preferred_element_type=jnp.float32) + b1_ref[...]     # (N,32)
        h1b = h1.astype(jnp.bfloat16)

        # Conv1d(32->16, k=3, pad=1) in "shift-the-results" form:
        #   y[t] = p0[t-1] + p1[t] + p2[t+1],  p_k = h1 @ Wk^T
        # Three small bf16 matmuls share the same LHS; rolls/masks act on
        # narrow (N,16) tiles and there is no lane-concat relayout.
        p0 = jnp.dot(h1b, wc_ref[0], preferred_element_type=jnp.float32)
        p1 = jnp.dot(h1b, wc_ref[1], preferred_element_type=jnp.float32)
        p2 = jnp.dot(h1b, wc_ref[2], preferred_element_type=jnp.float32)

        # one iota reused for both boundary compares (position within sequence)
        if BB == 1:
            pos = lax.broadcasted_iota(jnp.int32, (N, 16), 0)
        else:
            pos = lax.broadcasted_iota(jnp.int32, (BB, L, 16), 1).reshape(N, 16)
        p0s = jnp.where(pos == 0, 0.0, pltpu.roll(p0, shift=1, axis=0))
        p2s = jnp.where(pos == L - 1, 0.0, pltpu.roll(p2, shift=N - 1, axis=0))
        y = jnp.maximum(p1 + p0s + p2s + bc_ref[...], 0.0)                 # (N,16)

        # liner2, emitted tag-major (8, N): lane-dense, full-sublane stores.
        # Both operands contract on their last dim (the q @ k^T MXU pattern),
        # so no transpose of the big y tile is materialized.
        out_t = lax.dot_general(
            w2_ref[...], y.astype(jnp.bfloat16), (((1,), (1,)), ((), ())),
            preferred_element_type=jnp.float32) + b2_ref[...]              # (8,N)
        out_ref[0] = out_t

    def const_spec(shape):
        zeros = (0,) * len(shape)
        return pl.BlockSpec(shape, lambda b, z=zeros: z)

    out = pl.pallas_call(
        kernel,
        out_shape=jax.ShapeDtypeStruct((nb, 8, N), jnp.float32),
        grid_spec=pltpu.PrefetchScalarGridSpec(
            num_scalar_prefetch=0,
            grid=(nb,),
            in_specs=[
                pl.BlockSpec((N, D), lambda b: (b, 0)),        # x rows, batch-blocked
                const_spec((D, 32)), const_spec((1, 32)),      # liner1
                const_spec((3, 32, 16)), const_spec((1, 16)),  # conv taps
                const_spec((8, 16)), const_spec((8, 1)),       # liner2 (8-sublane pad)
            ],
            out_specs=pl.BlockSpec((1, 8, N), lambda b: (b, 0, 0)),
        ),
        compiler_params=pltpu.CompilerParams(
            # TODO(synk): verify "parallel" actually shards the batch grid over
            # both v7x TensorCores; switch to pltpu.CORE_PARALLEL if it does not.
            dimension_semantics=("parallel",),
            vmem_limit_bytes=(40 if multicore else 56) * 1024 * 1024,
        ),
    )(x2, w1t, b1, wc_all, bc, w2p, b2p)

    # (nb, 8, BB*L) tag-major -> (B, L, 2); padded tags / sequences sliced off.
    em = out.reshape(nb, 8, BB, L).transpose(0, 2, 3, 1).reshape(nb * BB, L, 8)
    return em[:B, :, :2]


# ----------------------------------------------------------------------------
# CRF glue (torchcrf semantics, 2 tags, batch_first=True, reduction='sum').
# ----------------------------------------------------------------------------
def length_to_mask(length, max_len):
    return jnp.arange(max_len)[None, :] < length[:, None]


def crf_neg_log_likelihood(emissions, tags, mask, start_t, end_t, trans):
    em = jnp.transpose(emissions, (1, 0, 2))                    # (L, B, T)
    tg = jnp.transpose(tags, (1, 0))                            # (L, B)
    mk = jnp.transpose(mask, (1, 0)).astype(emissions.dtype)    # (L, B)
    L, B, T = em.shape
    idx = jnp.arange(B)

    # numerator (gold path score)
    num = start_t[tg[0]] + em[0, idx, tg[0]]
    em_scores = jnp.take_along_axis(em, tg[..., None], axis=2)[..., 0]    # (L, B)
    trans_scores = trans[tg[:-1], tg[1:]]                                 # (L-1, B)
    num = num + jnp.sum((trans_scores + em_scores[1:]) * mk[1:], axis=0)
    seq_ends = mk.sum(axis=0).astype(jnp.int32) - 1
    num = num + end_t[tg[seq_ends, idx]]

    # denominator (partition, forward algorithm)
    score0 = start_t[None, :] + em[0]                                     # (B, T)

    def step(score, inp):
        em_i, mk_i = inp
        nxt = jax.scipy.special.logsumexp(
            score[:, :, None] + trans[None, :, :] + em_i[:, None, :], axis=1)
        return jnp.where(mk_i[:, None] > 0, nxt, score), None

    score, _ = lax.scan(step, score0, (em[1:], mk[1:]))
    denom = jax.scipy.special.logsumexp(score + end_t[None, :], axis=1)
    return -jnp.sum(num - denom)     # torchcrf reduction='sum'; module returns -loss


def crf_viterbi_decode(emissions, mask, start_t, end_t, trans):
    """Device-side Viterbi (torchcrf semantics) via lax.scan; returns a (B, L)
    int32 best-tag array (positions beyond each sequence length are padding).
    Assumes every sequence has at least one unmasked position (as torchcrf does).
    """
    em = jnp.transpose(emissions, (1, 0, 2))                    # (L, B, T)
    mk = jnp.transpose(mask, (1, 0))                            # (L, B) bool
    L, B, T = em.shape
    score0 = start_t[None, :] + em[0]                           # (B, T)

    def fwd(score, inp):
        em_i, mk_i = inp
        cand = score[:, :, None] + trans[None, :, :] + em_i[:, None, :]   # (B,T,T)
        nxt = cand.max(axis=1)
        idx = jnp.argmax(cand, axis=1).astype(jnp.int32)
        return jnp.where(mk_i[:, None], nxt, score), idx

    score, history = lax.scan(fwd, score0, (em[1:], mk[1:]))    # history (L-1,B,T)
    last_tag = jnp.argmax(score + end_t[None, :], axis=1).astype(jnp.int32)

    def bwd(tag, inp):
        hist_i, mk_i = inp
        prev = jnp.take_along_axis(hist_i, tag[:, None], axis=1)[:, 0]
        tag = jnp.where(mk_i, prev, tag)
        return tag, tag

    _, tags_head = lax.scan(bwd, last_tag, (history, mk[1:]), reverse=True)  # (L-1,B)
    tags = jnp.concatenate([tags_head, last_tag[None, :]], axis=0)           # (L, B)
    return jnp.transpose(tags, (1, 0))


# ----------------------------------------------------------------------------
# Deterministic parameter init (shapes from the nn.Module __init__).
# ----------------------------------------------------------------------------
def init_params(key, esm_dim):
    d_in = esm_dim + 50
    ks = jax.random.split(key, 9)
    u = lambda k, shape, s: jax.random.uniform(k, shape, jnp.float32, -s, s)
    return {
        "w1": u(ks[0], (32, d_in), 1.0 / np.sqrt(d_in)),
        "b1": u(ks[1], (32,), 1.0 / np.sqrt(d_in)),
        "wc": u(ks[2], (16, 32, 3), 1.0 / np.sqrt(32 * 3)),
        "bc": u(ks[3], (16,), 1.0 / np.sqrt(32 * 3)),
        "w2": u(ks[4], (2, 16), 1.0 / np.sqrt(16)),
        "b2": u(ks[5], (2,), 1.0 / np.sqrt(16)),
        "crf_start": u(ks[6], (2,), 0.1),
        "crf_end": u(ks[7], (2,), 0.1),
        "crf_trans": u(ks[8], (2, 2), 0.1),
    }


def emissions_reference(x, p):
    """Pure-JAX reference of _get_emission using the same bf16 MXU-operand
    casts as the kernel (f32 accumulation everywhere)."""
    bf = jnp.bfloat16
    B, L, _ = x.shape
    h1 = jnp.dot(x.astype(bf), p["w1"].T.astype(bf),
                 preferred_element_type=jnp.float32) + p["b1"]
    h1b = h1.astype(bf)
    pk = [jnp.dot(h1b, p["wc"][:, :, k].T.astype(bf),
                  preferred_element_type=jnp.float32) for k in range(3)]
    p0s = jnp.pad(pk[0], ((0, 0), (1, 0), (0, 0)))[:, :L]
    p2s = jnp.pad(pk[2], ((0, 0), (0, 1), (0, 0)))[:, 1:]
    y = jnp.maximum(pk[1] + p0s + p2s + p["bc"], 0.0)
    return (jnp.dot(y.astype(bf), p["w2"].T.astype(bf),
                    preferred_element_type=jnp.float32) + p["b2"])


# ----------------------------------------------------------------------------
# forward (module semantics): returns (-crf_llh, decoded tag lists, emissions).
# ----------------------------------------------------------------------------
@jax.jit
def _forward_device(x, tokens_length, labels, params):
    emissions = get_emissions(x, params)                         # Pallas kernel
    mask = length_to_mask(tokens_length, x.shape[1])
    neg_loss = crf_neg_log_likelihood(
        emissions, labels, mask,
        params["crf_start"], params["crf_end"], params["crf_trans"])
    tags = crf_viterbi_decode(
        emissions, mask,
        params["crf_start"], params["crf_end"], params["crf_trans"])
    return neg_loss, emissions, tags


def forward(x, tokens_length, labels, params):
    neg_loss, emissions, tags = _forward_device(x, tokens_length, labels, params)
    tags_np = np.asarray(tags)                     # single small host transfer
    lens = np.asarray(tokens_length)
    out = [tags_np[b, :int(n)].tolist() for b, n in enumerate(lens)]
    return neg_loss, out, emissions


if __name__ == "__main__":
    B, L, esm_dim = 2, 16, 78        # D_in = esm_dim + 50 = 128
    key = jax.random.PRNGKey(0)
    kp, kx, kl = jax.random.split(key, 3)

    params = init_params(kp, esm_dim)
    x = jax.random.normal(kx, (B, L, esm_dim + 50), jnp.float32)
    tokens_length = jnp.array([16, 11], jnp.int32)
    labels = jax.random.randint(kl, (B, L), 0, 2, jnp.int32)

    neg_loss, decoded, emissions = forward(x, tokens_length, labels, params)
    jax.block_until_ready((neg_loss, emissions))

    # sanity check Pallas emissions against the pure-JAX reference
    ref = emissions_reference(x, params)
    np.testing.assert_allclose(np.asarray(emissions), np.asarray(ref),
                               rtol=2e-3, atol=2e-3)
    assert np.isfinite(float(neg_loss))
    assert len(decoded) == B and len(decoded[0]) == int(tokens_length[0])
    assert len(decoded[1]) == int(tokens_length[1])

    print("KERNEL_OK")
</pallas_src>

<mosaic_0001>
module attributes {stable_mosaic.version = 11 : i64} {
  func.func @kernel(%arg0: i32, %arg1: memref<32x128xf32, #tpu.memory_space<vmem>>, %arg2: memref<128x32xbf16, #tpu.memory_space<vmem>>, %arg3: memref<1x32xf32, #tpu.memory_space<vmem>>, %arg4: memref<3x32x16xbf16, #tpu.memory_space<vmem>>, %arg5: memref<1x16xf32, #tpu.memory_space<vmem>>, %arg6: memref<8x16xbf16, #tpu.memory_space<vmem>>, %arg7: memref<8x1xf32, #tpu.memory_space<vmem>>, %arg8: memref<1x8x32xf32, #tpu.memory_space<vmem>>) attributes {dimension_semantics = [#tpu.dimension_semantics<parallel>], iteration_bounds = array<i64: 1>, scalar_prefetch = 0 : i64, scratch_operands = 0 : i64, tpu.core_type = #tpu.core_type<tc>, window_params = [{transform_indices = @transform_0, window_bounds = array<i64: 32, 128>}, {pipeline_mode = #tpu.pipeline_mode<synchronous>, transform_indices = @transform_1, window_bounds = array<i64: 128, 32>}, {pipeline_mode = #tpu.pipeline_mode<synchronous>, transform_indices = @transform_2, window_bounds = array<i64: 1, 32>}, {pipeline_mode = #tpu.pipeline_mode<synchronous>, transform_indices = @transform_3, window_bounds = array<i64: 3, 32, 16>}, {pipeline_mode = #tpu.pipeline_mode<synchronous>, transform_indices = @transform_4, window_bounds = array<i64: 1, 16>}, {pipeline_mode = #tpu.pipeline_mode<synchronous>, transform_indices = @transform_5, window_bounds = array<i64: 8, 16>}, {pipeline_mode = #tpu.pipeline_mode<synchronous>, transform_indices = @transform_6, window_bounds = array<i64: 8, 1>}, {transform_indices = @transform_7, window_bounds = array<i64: 1, 8, 32>}]} {
    %c0 = arith.constant 0 : index
    %c0_0 = arith.constant 0 : index
    %0 = vector.load %arg1[%c0, %c0_0] : memref<32x128xf32, #tpu.memory_space<vmem>>, vector<32x128xf32>
    %1 = arith.truncf %0 : vector<32x128xf32> to vector<32x128xbf16>
    %c0_1 = arith.constant 0 : index
    %c0_2 = arith.constant 0 : index
    %2 = vector.load %arg2[%c0_1, %c0_2] : memref<128x32xbf16, #tpu.memory_space<vmem>>, vector<128x32xbf16>
    %cst = arith.constant dense<0.000000e+00> : vector<32x32xf32>
    %3 = tpu.matmul %1, %2, %cst {dimension_numbers = #tpu.dot_dimension_numbers<[1], [0], [0], [1], [0, 0, 1, 1], [], []>} : vector<32x128xbf16>, vector<128x32xbf16>, vector<32x32xf32> -> vector<32x32xf32>
    %c0_3 = arith.constant 0 : index
    %c0_4 = arith.constant 0 : index
    %4 = vector.load %arg3[%c0_3, %c0_4] : memref<1x32xf32, #tpu.memory_space<vmem>>, vector<1x32xf32>
    %5 = vector.broadcast %4 : vector<1x32xf32> to vector<32x32xf32>
    %6 = arith.addf %3, %5 : vector<32x32xf32>
    %7 = arith.truncf %6 : vector<32x32xf32> to vector<32x32xbf16>
    %c0_5 = arith.constant 0 : index
    %c0_6 = arith.constant 0 : index
    %c0_7 = arith.constant 0 : index
    %8 = vector.load %arg4[%c0_5, %c0_6, %c0_7] : memref<3x32x16xbf16, #tpu.memory_space<vmem>>, vector<1x32x16xbf16>
    %9 = vector.shape_cast %8 : vector<1x32x16xbf16> to vector<32x16xbf16>
    %cst_8 = arith.constant dense<0.000000e+00> : vector<32x16xf32>
    %10 = tpu.matmul %7, %9, %cst_8 {dimension_numbers = #tpu.dot_dimension_numbers<[1], [0], [0], [1], [0, 0, 1, 1], [], []>} : vector<32x32xbf16>, vector<32x16xbf16>, vector<32x16xf32> -> vector<32x16xf32>
    %c1 = arith.constant 1 : index
    %c0_9 = arith.constant 0 : index
    %c0_10 = arith.constant 0 : index
    %11 = vector.load %arg4[%c1, %c0_9, %c0_10] : memref<3x32x16xbf16, #tpu.memory_space<vmem>>, vector<1x32x16xbf16>
    %12 = vector.shape_cast %11 : vector<1x32x16xbf16> to vector<32x16xbf16>
    %cst_11 = arith.constant dense<0.000000e+00> : vector<32x16xf32>
    %13 = tpu.matmul %7, %12, %cst_11 {dimension_numbers = #tpu.dot_dimension_numbers<[1], [0], [0], [1], [0, 0, 1, 1], [], []>} : vector<32x32xbf16>, vector<32x16xbf16>, vector<32x16xf32> -> vector<32x16xf32>
    %c2 = arith.constant 2 : index
    %c0_12 = arith.constant 0 : index
    %c0_13 = arith.constant 0 : index
    %14 = vector.load %arg4[%c2, %c0_12, %c0_13] : memref<3x32x16xbf16, #tpu.memory_space<vmem>>, vector<1x32x16xbf16>
    %15 = vector.shape_cast %14 : vector<1x32x16xbf16> to vector<32x16xbf16>
    %cst_14 = arith.constant dense<0.000000e+00> : vector<32x16xf32>
    %16 = tpu.matmul %7, %15, %cst_14 {dimension_numbers = #tpu.dot_dimension_numbers<[1], [0], [0], [1], [0, 0, 1, 1], [], []>} : vector<32x32xbf16>, vector<32x16xbf16>, vector<32x16xf32> -> vector<32x16xf32>
    %17 = tpu.iota {dimensions = array<i32: 1>} : vector<2x16x16xi32>
    %18 = vector.shape_cast %17 : vector<2x16x16xi32> to vector<32x16xi32>
    %c0_i32 = arith.constant 0 : i32
    %19 = vector.broadcast %c0_i32 : i32 to vector<32x16xi32>
    %20 = arith.cmpi eq, %18, %19 : vector<32x16xi32>
    %c1_i32 = arith.constant 1 : i32
    %21 = tpu.dynamic_rotate %10 by %c1_i32 dim 0 : vector<32x16xf32>, i32 -> vector<32x16xf32>
    %cst_15 = arith.constant 0.000000e+00 : f32
    %22 = vector.broadcast %cst_15 : f32 to vector<32x16xf32>
    %23 = arith.select %20, %22, %21 : vector<32x16xi1>, vector<32x16xf32>
    %c15_i32 = arith.constant 15 : i32
    %24 = vector.broadcast %c15_i32 : i32 to vector<32x16xi32>
    %25 = arith.cmpi eq, %18, %24 : vector<32x16xi32>
    %c31_i32 = arith.constant 31 : i32
    %26 = tpu.dynamic_rotate %16 by %c31_i32 dim 0 : vector<32x16xf32>, i32 -> vector<32x16xf32>
    %cst_16 = arith.constant 0.000000e+00 : f32
    %27 = vector.broadcast %cst_16 : f32 to vector<32x16xf32>
    %28 = arith.select %25, %27, %26 : vector<32x16xi1>, vector<32x16xf32>
    %29 = arith.addf %13, %23 : vector<32x16xf32>
    %30 = arith.addf %29, %28 : vector<32x16xf32>
    %c0_17 = arith.constant 0 : index
    %c0_18 = arith.constant 0 : index
    %31 = vector.load %arg5[%c0_17, %c0_18] : memref<1x16xf32, #tpu.memory_space<vmem>>, vector<1x16xf32>
    %32 = vector.broadcast %31 : vector<1x16xf32> to vector<32x16xf32>
    %33 = arith.addf %30, %32 : vector<32x16xf32>
    %cst_19 = arith.constant 0.000000e+00 : f32
    %34 = vector.broadcast %cst_19 : f32 to vector<32x16xf32>
    %35 = arith.maximumf %33, %34 : vector<32x16xf32>
    %c0_20 = arith.constant 0 : index
    %c0_21 = arith.constant 0 : index
    %36 = vector.load %arg6[%c0_20, %c0_21] : memref<8x16xbf16, #tpu.memory_space<vmem>>, vector<8x16xbf16>
    %37 = arith.truncf %35 : vector<32x16xf32> to vector<32x16xbf16>
    %cst_22 = arith.constant dense<0.000000e+00> : vector<8x32xf32>
    %38 = tpu.matmul %36, %37, %cst_22 {dimension_numbers = #tpu.dot_dimension_numbers<[1], [1], [0], [0], [0, 0, 1, 0], [], []>} : vector<8x16xbf16>, vector<32x16xbf16>, vector<8x32xf32> -> vector<8x32xf32>
    %c0_23 = arith.constant 0 : index
    %c0_24 = arith.constant 0 : index
    %39 = vector.load %arg7[%c0_23, %c0_24] : memref<8x1xf32, #tpu.memory_space<vmem>>, vector<8x1xf32>
    %40 = vector.broadcast %39 : vector<8x1xf32> to vector<8x32xf32>
    %41 = arith.addf %38, %40 : vector<8x32xf32>
    %c0_25 = arith.constant 0 : index
    %c0_26 = arith.constant 0 : index
    %c0_27 = arith.constant 0 : index
    %42 = vector.load %arg8[%c0_25, %c0_26, %c0_27] : memref<1x8x32xf32, #tpu.memory_space<vmem>>, vector<1x8x32xf32>
    %43 = vector.shape_cast %42 : vector<1x8x32xf32> to vector<8x32xf32>
    %44 = vector.shape_cast %41 : vector<8x32xf32> to vector<1x8x32xf32>
    tpu.vector_store %arg8[%c0_25, %c0_26, %c0_27], %44 {strides = array<i32>} : memref<1x8x32xf32, #tpu.memory_space<vmem>>, vector<1x8x32xf32>,
    return
  }
  func.func @transform_0(%arg0: i32) -> (i32, i32) {
    %c0_i32 = arith.constant 0 : i32
    %c0_i32_0 = arith.constant 0 : i32
    return %arg0, %c0_i32 : i32, i32
  }
  func.func @transform_1(%arg0: i32) -> (i32, i32) {
    %c0_i32 = arith.constant 0 : i32
    %c0_i32_0 = arith.constant 0 : i32
    %c0_i32_1 = arith.constant 0 : i32
    return %c0_i32, %c0_i32_0 : i32, i32
  }
  func.func @transform_2(%arg0: i32) -> (i32, i32) {
    %c0_i32 = arith.constant 0 : i32
    %c0_i32_0 = arith.constant 0 : i32
    %c0_i32_1 = arith.constant 0 : i32
    return %c0_i32, %c0_i32_0 : i32, i32
  }
  func.func @transform_3(%arg0: i32) -> (i32, i32, i32) {
    %c0_i32 = arith.constant 0 : i32
    %c0_i32_0 = arith.constant 0 : i32
    %c0_i32_1 = arith.constant 0 : i32
    %c0_i32_2 = arith.constant 0 : i32
    return %c0_i32, %c0_i32_0, %c0_i32_1 : i32, i32, i32
  }
  func.func @transform_4(%arg0: i32) -> (i32, i32) {
    %c0_i32 = arith.constant 0 : i32
    %c0_i32_0 = arith.constant 0 : i32
    %c0_i32_1 = arith.constant 0 : i32
    return %c0_i32, %c0_i32_0 : i32, i32
  }
  func.func @transform_5(%arg0: i32) -> (i32, i32) {
    %c0_i32 = arith.constant 0 : i32
    %c0_i32_0 = arith.constant 0 : i32
    %c0_i32_1 = arith.constant 0 : i32
    return %c0_i32, %c0_i32_0 : i32, i32
  }
  func.func @transform_6(%arg0: i32) -> (i32, i32) {
    %c0_i32 = arith.constant 0 : i32
    %c0_i32_0 = arith.constant 0 : i32
    %c0_i32_1 = arith.constant 0 : i32
    return %c0_i32, %c0_i32_0 : i32, i32
  }
  func.func @transform_7(%arg0: i32) -> (i32, i32, i32) {
    %c0_i32 = arith.constant 0 : i32
    %c0_i32_0 = arith.constant 0 : i32
    %c0_i32_1 = arith.constant 0 : i32
    return %arg0, %c0_i32, %c0_i32_0 : i32, i32, i32
  }
}

</mosaic_0001>

<llo_original>
// kernel: custom-call.14
$region0: #{custom-call.14}
  %s0 = inlined_call_operand.vmem [shape: s32[15,2,2], index: 0, kind: output, shape index: {}]

// kernel: _forward_device.1
$region0: #{_forward_device.1}
  #allocation0 [shape = 'u32[]', space=smem, size = 0x4, offset = 0x4, fixed_abs, tag = 'smem constant byte address 0x4 - core index']
  #allocation1 [shape = 'u32[144,128]{1,0:T(1,128)}', space=vmem, size = 0x12000, scoped, tag = 'internal scratch']
  %s0 = inlined_call_operand.vmem [shape: f32[32,128], index: 0, kind: input, shape index: {}]
  %s1 = inlined_call_operand.vmem [shape: bf16[128,32], index: 1, kind: input, shape index: {}]
  %s2 = inlined_call_operand.vmem [shape: f32[1,32], index: 2, kind: input, shape index: {}]
  %s3 = inlined_call_operand.vmem [shape: bf16[3,32,16], index: 3, kind: input, shape index: {}]
  %s4 = inlined_call_operand.vmem [shape: f32[1,16], index: 4, kind: input, shape index: {}]
  %s5 = inlined_call_operand.vmem [shape: bf16[8,16], index: 5, kind: input, shape index: {}]
  %s6 = inlined_call_operand.vmem [shape: f32[8,1], index: 6, kind: input, shape index: {}]
  %s7 = inlined_call_operand.vmem [shape: f32[1,8,32], index: 7, kind: output, shape index: {}]
  %s8 = sld [smem:[#allocation0]]
  $region38: #{_forward_device.1} parent=0
    _
  %s10 = ssub.s32 1, %s8
  %s11 = scalar_select 0, %s10, %s8
  // Predicated region
  $region2: #{_forward_device.1} parent=0 // pred_check
    _
  $region3: #{_forward_device.1} parent=0 // pred_check_branch
    %13 = sbr.rel (0) target = $region5
  $region4: #{_forward_device.1} parent=0 // pred_region
    _
  $region5: #{_forward_device.1} parent=0 // pred_fallthru
    _
  // Predicated region
  $region6: #{_forward_device.1} parent=0 // pred_check
    _
  $region7: #{_forward_device.1} parent=0 // pred_check_branch
    %15 = sbr.rel (0) target = $region9
  $region8: #{_forward_device.1} parent=0 // pred_region
    _
  $region9: #{_forward_device.1} parent=0 // pred_fallthru
    _
  // Predicated region
  $region10: #{_forward_device.1} parent=0 // pred_check
    _
  $region11: #{_forward_device.1} parent=0 // pred_check_branch
    %17 = sbr.rel (0) target = $region13
  $region12: #{_forward_device.1} parent=0 // pred_region
    _
  $region13: #{_forward_device.1} parent=0 // pred_fallthru
    _
  // Predicated region
  $region14: #{_forward_device.1} parent=0 // pred_check
    _
  $region15: #{_forward_device.1} parent=0 // pred_check_branch
    %19 = sbr.rel (0) target = $region17
  $region16: #{_forward_device.1} parent=0 // pred_region
    _
  $region17: #{_forward_device.1} parent=0 // pred_fallthru
    _
  // Predicated region
  $region18: #{_forward_device.1} parent=0 // pred_check
    _
  $region19: #{_forward_device.1} parent=0 // pred_check_branch
    %21 = sbr.rel (0) target = $region21
  $region20: #{_forward_device.1} parent=0 // pred_region
    _
  $region21: #{_forward_device.1} parent=0 // pred_fallthru
    _
  // Predicated region
  $region22: #{_forward_device.1} parent=0 // pred_check
    _
  $region23: #{_forward_device.1} parent=0 // pred_check_branch
    %23 = sbr.rel (0) target = $region25
  $region24: #{_forward_device.1} parent=0 // pred_region
    _
  $region25: #{_forward_device.1} parent=0 // pred_fallthru
    _
  // Predicated region
  $region26: #{_forward_device.1} parent=0 // pred_check
    _
  $region27: #{_forward_device.1} parent=0 // pred_check_branch
    %25 = sbr.rel (0) target = $region29
  $region28: #{_forward_device.1} parent=0 // pred_region
    _
  $region29: #{_forward_device.1} parent=0 // pred_fallthru
    _
  %v27 = vld [vmem:[%s0] sm:$0xff]
  %v28 = vld [vmem:[%s0 + $0x8] sm:$0xff]
  %v29 = vld [vmem:[%s0 + $0x10] sm:$0xff]
  %v30 = vld [vmem:[%s0 + $0x18] sm:$0xff]
  %v31 = vpack.c.bf16 %v28, %v27
  %v32 = vpack.c.bf16 %v30, %v29
  %v33 = vld [vmem:[%s1] sm:$0xf]
  %v34 = vld [vmem:[%s1 + $0x4] sm:$0xf]
  %v35 = vld [vmem:[%s1 + $0x8] sm:$0xf]
  %v36 = vld [vmem:[%s1 + $0xc] sm:$0xf]
  %v37 = vld [vmem:[%s1 + $0x10] sm:$0xf]
  %v38 = vld [vmem:[%s1 + $0x14] sm:$0xf]
  %v39 = vld [vmem:[%s1 + $0x18] sm:$0xf]
  %v40 = vld [vmem:[%s1 + $0x1c] sm:$0xf]
  %v41 = vld [vmem:[%s1 + $0x20] sm:$0xf]
  %v42 = vld [vmem:[%s1 + $0x24] sm:$0xf]
  %v43 = vld [vmem:[%s1 + $0x28] sm:$0xf]
  %v44 = vld [vmem:[%s1 + $0x2c] sm:$0xf]
  %v45 = vld [vmem:[%s1 + $0x30] sm:$0xf]
  %v46 = vld [vmem:[%s1 + $0x34] sm:$0xf]
  %v47 = vld [vmem:[%s1 + $0x38] sm:$0xf]
  %v48 = vld [vmem:[%s1 + $0x3c] sm:$0xf]
  %v49 = vld [vmem:[%s2] sm:$0x1]
  %v51 = vlaneseq
  %v52 = vshrl.u32 %v51, 7
  %v53 = vsub.s32 0, %v52
  %v54 = vrot.slane %v49, %v53
  %v72 = vunpack.c.l.b16 %v33
  %v73 = vunpack.c.l.b16 %v34
  %v74 = vunpack.c.l.b16 %v35
  %v75 = vunpack.c.l.b16 %v36
  %v76 = vunpack.c.l.b16 %v37
  %v77 = vunpack.c.l.b16 %v38
  %v78 = vunpack.c.l.b16 %v39
  %v79 = vunpack.c.l.b16 %v40
  %v80 = vunpack.c.l.b16 %v41
  %v81 = vunpack.c.l.b16 %v42
  %v82 = vunpack.c.l.b16 %v43
  %v83 = vunpack.c.l.b16 %v44
  %v84 = vunpack.c.l.b16 %v45
  %v85 = vunpack.c.l.b16 %v46
  %v86 = vunpack.c.l.b16 %v47
  %v87 = vunpack.c.l.b16 %v48
  %v88 = vpack.c.b16 %v73, %v72
  %v89 = vpack.c.b16 %v75, %v74
  %v90 = vpack.c.b16 %v77, %v76
  %v91 = vpack.c.b16 %v79, %v78
  %v92 = vpack.c.b16 %v81, %v80
  %v93 = vpack.c.b16 %v83, %v82
  %v94 = vpack.c.b16 %v85, %v84
  %v95 = vpack.c.b16 %v87, %v86
  %104 = vmatprep.subr.bf16.mxu0 0
  %105 = vmatpush1.bf16.msra.mxu0 %v88
  %106 = vmatprep.subr.bf16.mxu0 0
  %107 = vmatpush1.bf16.msra.mxu0 %v89
  %108 = vmatprep.subr.bf16.mxu0 0
  %109 = vmatpush1.bf16.msra.mxu0 %v90
  %110 = vmatprep.subr.bf16.mxu0 0
  %111 = vmatpush1.bf16.msra.mxu0 %v91
  %112 = vmatprep.subr.bf16.mxu0 0
  %113 = vmatpush1.bf16.msra.mxu0 %v92
  %114 = vmatprep.subr.bf16.mxu0 0
  %115 = vmatpush1.bf16.msra.mxu0 %v93
  %116 = vmatprep.subr.bf16.mxu0 0
  %117 = vmatpush1.bf16.msra.mxu0 %v94
  %118 = vmatprep.subr.bf16.mxu0 0
  %119 = vmatpush1.bf16.msra.mxu0 %v95
  %120 = vmatprep.subr.bf16.mxu0 0
  %121 = vmatpush1.bf16.msra.mxu0 0
  %122 = vmatprep.subr.bf16.mxu0 0
  %123 = vmatpush1.bf16.msra.mxu0 0
  %124 = vmatprep.subr.bf16.mxu0 0
  %125 = vmatpush1.bf16.msra.mxu0 0
  %126 = vmatprep.subr.bf16.mxu0 0
  %127 = vmatpush1.bf16.msra.mxu0 0
  %128 = vmatprep.subr.bf16.mxu0 0
  %129 = vmatpush1.bf16.msra.mxu0 0
  %130 = vmatprep.subr.bf16.mxu0 0
  %131 = vmatpush1.bf16.msra.mxu0 0
  %132 = vmatprep.subr.bf16.mxu0 0
  %133 = vmatpush1.bf16.msra.mxu0 0
  %134 = vmatprep.subr.bf16.mxu0 0
  %135 = vmatpush1.bf16.msra.mxu0 0
  %136 = vmatprep.mubr.bf16.mxu0 0
  %137 = vmatmul.mubr.bf16.gmra.mrb[0].mxu0 %v31
  %v138 = vpop.f32.mrb[0].mxu0
  %v139 = vadd.f32 %v54, %v138
  %v140 = vpop.f32.mrb[0].mxu0
  %v141 = vpop.f32.mrb[0].mxu0
  %v142 = vadd.f32 %v54, %v141
  %v143 = vpop.f32.mrb[0].mxu0
  %144 = vmatprep.mubr.bf16.mxu0 0
  %145 = vmatmul.mubr.bf16.gmra.mrb[0].mxu0 %v32
  %v146 = vpop.f32.mrb[0].mxu0
  %v147 = vadd.f32 %v54, %v146
  %v148 = vpop.f32.mrb[0].mxu0
  %v149 = vpop.f32.mrb[0].mxu0
  %v150 = vadd.f32 %v54, %v149
  %v151 = vpop.f32.mrb[0].mxu0
  %152 = vdwg.mxu0
  %v153 = vpack.c.bf16 %v142, %v139
  %v154 = vpack.c.bf16 %v150, %v147
  %v155 = vld [vmem:[%s3] sm:$0xf]
  %v156 = vld [vmem:[%s3 + $0x4] sm:$0xf]
  %v157 = vld [vmem:[%s3 + $0x8] sm:$0xf]
  %v158 = vld [vmem:[%s3 + $0xc] sm:$0xf]
  %v163 = vunpack.c.l.b16 %v155
  %v164 = vunpack.c.l.b16 %v156
  %v165 = vunpack.c.l.b16 %v157
  %v166 = vunpack.c.l.b16 %v158
  %v167 = vpack.c.b16 %v164, %v163
  %v168 = vpack.c.b16 %v166, %v165
  %vm171 = vcmask 261120
  %v173 = vsel %vm171, %v153, 0
  %v176 = vsel %vm171, %v154, 0
  %178 = vmatprep.subr.bf16.mxu0 0
  %179 = vmatpush1.bf16.msra.mxu0 %v167
  %180 = vmatprep.subr.bf16.mxu0 0
  %181 = vmatpush1.bf16.msra.mxu0 %v168
  %182 = vmatprep.subr.bf16.mxu0 0
  %183 = vmatpush1.bf16.msra.mxu0 0
  %184 = vmatprep.subr.bf16.mxu0 0
  %185 = vmatpush1.bf16.msra.mxu0 0
  %186 = vmatprep.subr.bf16.mxu0 0
  %187 = vmatpush1.bf16.msra.mxu0 0
  %188 = vmatprep.subr.bf16.mxu0 0
  %189 = vmatpush1.bf16.msra.mxu0 0
  %190 = vmatprep.subr.bf16.mxu0 0
  %191 = vmatpush1.bf16.msra.mxu0 0
  %192 = vmatprep.subr.bf16.mxu0 0
  %193 = vmatpush1.bf16.msra.mxu0 0
  %194 = vmatprep.subr.bf16.mxu0 0
  %195 = vmatpush1.bf16.msra.mxu0 0
  %196 = vmatprep.subr.bf16.mxu0 0
  %197 = vmatpush1.bf16.msra.mxu0 0
  %198 = vmatprep.subr.bf16.mxu0 0
  %199 = vmatpush1.bf16.msra.mxu0 0
  %200 = vmatprep.subr.bf16.mxu0 0
  %201 = vmatpush1.bf16.msra.mxu0 0
  %202 = vmatprep.subr.bf16.mxu0 0
  %203 = vmatpush1.bf16.msra.mxu0 0
  %204 = vmatprep.subr.bf16.mxu0 0
  %205 = vmatpush1.bf16.msra.mxu0 0
  %206 = vmatprep.subr.bf16.mxu0 0
  %207 = vmatpush1.bf16.msra.mxu0 0
  %208 = vmatprep.subr.bf16.mxu0 0
  %209 = vmatpush1.bf16.msra.mxu0 0
  %210 = vmatprep.mubr.bf16.mxu0 0
  %211 = vmatmul.mubr.bf16.gmra.mrb[0].mxu0 %v173
  %v212 = vpop.f32.mrb[0].mxu0
  %v213 = vadd.f32 0.0, %v212
  %v214 = vpop.f32.mrb[0].mxu0
  %v215 = vpop.f32.mrb[0].mxu0
  %v216 = vadd.f32 0.0, %v215
  %v217 = vpop.f32.mrb[0].mxu0
  %218 = vmatprep.mubr.bf16.mxu0 0
  %219 = vmatmul.mubr.bf16.gmra.mrb[0].mxu0 %v176
  %v220 = vpop.f32.mrb[0].mxu0
  %v221 = vadd.f32 0.0, %v220
  %v222 = vpop.f32.mrb[0].mxu0
  %v223 = vpop.f32.mrb[0].mxu0
  %v224 = vadd.f32 0.0, %v223
  %v225 = vpop.f32.mrb[0].mxu0
  %226 = vdwg.mxu0
  %s227 = scalar_lea.vmem %s3, 16
  %v228 = vld [vmem:[%s227] sm:$0xf]
  %v229 = vld [vmem:[%s227 + $0x4] sm:$0xf]
  %v230 = vld [vmem:[%s227 + $0x8] sm:$0xf]
  %v231 = vld [vmem:[%s227 + $0xc] sm:$0xf]
  %s232 = scalar_lea.vmem %s3, 32
  %v233 = vld [vmem:[%s232] sm:$0xf]
  %v234 = vld [vmem:[%s232 + $0x4] sm:$0xf]
  %v235 = vld [vmem:[%s232 + $0x8] sm:$0xf]
  %v236 = vld [vmem:[%s232 + $0xc] sm:$0xf]
  %v241 = vunpack.c.l.b16 %v233
  %v242 = vunpack.c.l.b16 %v234
  %v243 = vunpack.c.l.b16 %v235
  %v244 = vunpack.c.l.b16 %v236
  %v245 = vpack.c.b16 %v242, %v241
  %v246 = vpack.c.b16 %v244, %v243
  %249 = vmatprep.subr.bf16.mxu0 0
  %250 = vmatpush1.bf16.msra.mxu0 %v245
  %251 = vmatprep.subr.bf16.mxu0 0
  %252 = vmatpush1.bf16.msra.mxu0 %v246
  %253 = vmatprep.subr.bf16.mxu0 0
  %254 = vmatpush1.bf16.msra.mxu0 0
  %255 = vmatprep.subr.bf16.mxu0 0
  %256 = vmatpush1.bf16.msra.mxu0 0
  %257 = vmatprep.subr.bf16.mxu0 0
  %258 = vmatpush1.bf16.msra.mxu0 0
  %259 = vmatprep.subr.bf16.mxu0 0
  %260 = vmatpush1.bf16.msra.mxu0 0
  %261 = vmatprep.subr.bf16.mxu0 0
  %262 = vmatpush1.bf16.msra.mxu0 0
  %263 = vmatprep.subr.bf16.mxu0 0
  %264 = vmatpush1.bf16.msra.mxu0 0
  %265 = vmatprep.subr.bf16.mxu0 0
  %266 = vmatpush1.bf16.msra.mxu0 0
  %267 = vmatprep.subr.bf16.mxu0 0
  %268 = vmatpush1.bf16.msra.mxu0 0
  %269 = vmatprep.subr.bf16.mxu0 0
  %270 = vmatpush1.bf16.msra.mxu0 0
  %271 = vmatprep.subr.bf16.mxu0 0
  %272 = vmatpush1.bf16.msra.mxu0 0
  %273 = vmatprep.subr.bf16.mxu0 0
  %274 = vmatpush1.bf16.msra.mxu0 0
  %275 = vmatprep.subr.bf16.mxu0 0
  %276 = vmatpush1.bf16.msra.mxu0 0
  %277 = vmatprep.subr.bf16.mxu0 0
  %278 = vmatpush1.bf16.msra.mxu0 0
  %279 = vmatprep.subr.bf16.mxu0 0
  %280 = vmatpush1.bf16.msra.mxu0 0
  %281 = vmatprep.mubr.bf16.mxu0 0
  %282 = vmatmul.mubr.bf16.gmra.mrb[0].mxu0 %v173
  %v283 = vpop.f32.mrb[0].mxu0
  %v284 = vadd.f32 0.0, %v283
  %v285 = vpop.f32.mrb[0].mxu0
  %v286 = vpop.f32.mrb[0].mxu0
  %v287 = vadd.f32 0.0, %v286
  %v288 = vpop.f32.mrb[0].mxu0
  %289 = vmatprep.mubr.bf16.mxu0 0
  %290 = vmatmul.mubr.bf16.gmra.mrb[0].mxu0 %v176
  %v291 = vpop.f32.mrb[0].mxu0
  %v292 = vadd.f32 0.0, %v291
  %v293 = vpop.f32.mrb[0].mxu0
  %v294 = vpop.f32.mrb[0].mxu0
  %v295 = vadd.f32 0.0, %v294
  %v296 = vpop.f32.mrb[0].mxu0
  %297 = vdwg.mxu0
  %v298 = vlaneseq
  %v299 = vshrl.u32 %v298, 7
  %v300 = vadd.s32 %v299, 8
  %vm301 = vcmp.eq.s32.totalorder %v299, 0
  %vm302 = vcmp.eq.s32.totalorder %v300, 0
  %v303 = vrot.slane %v213, 7
  %v304 = vrot.slane %v216, 7
  %v305 = vrot.slane %v221, 7
  %v306 = vrot.slane %v224, 7
  %vm307 = vcmp.lt.s32.totalorder %v299, 1
  %v308 = vsel %vm307, %v305, %v306
  %v309 = vsel %vm307, %v304, %v305
  %v310 = vsel %vm307, %v303, %v304
  %v311 = vsel %vm307, %v306, %v303
  %v312 = vsel %vm301, 0.0, %v311
  %v313 = vsel %vm302, 0.0, %v310
  %v314 = vsel %vm301, 0.0, %v309
  %v315 = vsel %vm302, 0.0, %v308
  %vm316 = vcmp.eq.s32.totalorder %v299, 15
  %vm317 = vcmp.eq.s32.totalorder %v300, 15
  %v318 = vrot.slane %v284, 1
  %v319 = vrot.slane %v287, 1
  %v320 = vrot.slane %v292, 1
  %v321 = vrot.slane %v295, 1
  %vm322 = vcmp.lt.s32.totalorder %v299, 7
  %v323 = vsel %vm322, %v320, %v321
  %v324 = vsel %vm322, %v319, %v320
  %v325 = vsel %vm322, %v318, %v319
  %v326 = vsel %vm322, %v321, %v318
  %v327 = vsel %vm316, 0.0, %v325
  %v328 = vsel %vm317, 0.0, %v324
  %v329 = vsel %vm316, 0.0, %v323
  %v330 = vsel %vm317, 0.0, %v326
  %v335 = vunpack.c.l.b16 %v228
  %v336 = vunpack.c.l.b16 %v229
  %v337 = vunpack.c.l.b16 %v230
  %v338 = vunpack.c.l.b16 %v231
  %v339 = vpack.c.b16 %v336, %v335
  %v340 = vpack.c.b16 %v338, %v337
  %343 = vmatprep.subr.bf16.mxu0 0
  %344 = vmatpush1.bf16.msra.mxu0 %v339
  %345 = vmatprep.subr.bf16.mxu0 0
  %346 = vmatpush1.bf16.msra.mxu0 %v340
  %347 = vmatprep.subr.bf16.mxu0 0
  %348 = vmatpush1.bf16.msra.mxu0 0
  %349 = vmatprep.subr.bf16.mxu0 0
  %350 = vmatpush1.bf16.msra.mxu0 0
  %351 = vmatprep.subr.bf16.mxu0 0
  %352 = vmatpush1.bf16.msra.mxu0 0
  %353 = vmatprep.subr.bf16.mxu0 0
  %354 = vmatpush1.bf16.msra.mxu0 0
  %355 = vmatprep.subr.bf16.mxu0 0
  %356 = vmatpush1.bf16.msra.mxu0 0
  %357 = vmatprep.subr.bf16.mxu0 0
  %358 = vmatpush1.bf16.msra.mxu0 0
  %359 = vmatprep.subr.bf16.mxu0 0
  %360 = vmatpush1.bf16.msra.mxu0 0
  %361 = vmatprep.subr.bf16.mxu0 0
  %362 = vmatpush1.bf16.msra.mxu0 0
  %363 = vmatprep.subr.bf16.mxu0 0
  %364 = vmatpush1.bf16.msra.mxu0 0
  %365 = vmatprep.subr.bf16.mxu0 0
  %366 = vmatpush1.bf16.msra.mxu0 0
  %367 = vmatprep.subr.bf16.mxu0 0
  %368 = vmatpush1.bf16.msra.mxu0 0
  %369 = vmatprep.subr.bf16.mxu0 0
  %370 = vmatpush1.bf16.msra.mxu0 0
  %371 = vmatprep.subr.bf16.mxu0 0
  %372 = vmatpush1.bf16.msra.mxu0 0
  %373 = vmatprep.subr.bf16.mxu0 0
  %374 = vmatpush1.bf16.msra.mxu0 0
  %375 = vmatprep.mubr.bf16.mxu0 0
  %376 = vmatmul.mubr.bf16.gmra.mrb[0].mxu0 %v173
  %v377 = vpop.f32.mrb[0].mxu0
  %v378 = vadd.f32 %v312, %v377
  %v379 = vpop.f32.mrb[0].mxu0
  %v380 = vpop.f32.mrb[0].mxu0
  %v381 = vadd.f32 %v313, %v380
  %v382 = vpop.f32.mrb[0].mxu0
  %383 = vmatprep.mubr.bf16.mxu0 0
  %384 = vmatmul.mubr.bf16.gmra.mrb[0].mxu0 %v176
  %v385 = vpop.f32.mrb[0].mxu0
  %v386 = vadd.f32 %v314, %v385
  %v387 = vpop.f32.mrb[0].mxu0
  %v388 = vpop.f32.mrb[0].mxu0
  %v389 = vadd.f32 %v315, %v388
  %v390 = vpop.f32.mrb[0].mxu0
  %391 = vdwg.mxu0
  %v392 = vadd.f32 %v378, %v327
  %v393 = vadd.f32 %v381, %v328
  %v394 = vadd.f32 %v386, %v329
  %v395 = vadd.f32 %v389, %v330
  %v396 = vld [vmem:[%s4] sm:$0x1]
  %v398 = vlaneseq
  %v399 = vshrl.u32 %v398, 7
  %v400 = vsub.s32 0, %v399
  %v401 = vrot.slane %v396, %v400
  %v403 = vadd.f32 %v392, %v401
  %v404 = vadd.f32 %v393, %v401
  %v405 = vadd.f32 %v394, %v401
  %v406 = vadd.f32 %v395, %v401
  %v407 = vmax.f32 %v403, 0.0
  %v408 = vmax.f32 %v404, 0.0
  %v409 = vmax.f32 %v405, 0.0
  %v410 = vmax.f32 %v406, 0.0
  %v411 = vld [vmem:[%s5] sm:$0xf]
  %v412 = vpack.c.bf16 %v408, %v407
  %v413 = vpack.c.bf16 %v410, %v409
  %v414 = vld [vmem:[%s6] sm:$0xff]
  %416 = vset.pattern.permute.xlu0 0
  %417 = vperm.xlu0 %416, %v414
  %v418 = vpop.permute.xlu0 %417
  %vm420 = vcmask 130048
  %v422 = vsel %vm420, %v411, 0
  %v425 = vsel %vm420, %v412, 0
  %v428 = vsel %vm420, %v413, 0
  %430 = vmatprep.subr.bf16.mxu0 0
  %431 = vmatpush1.bf16.xpose.msra.mxu0 %v425
  %432 = vmatprep.subr.bf16.mxu0 0
  %433 = vmatpush1.bf16.xpose.msra.mxu0 %v428
  %434 = vmatprep.subr.bf16.mxu0 0
  %435 = vmatpush1.bf16.xpose.msra.mxu0 0
  %436 = vmatprep.subr.bf16.mxu0 0
  %437 = vmatpush1.bf16.xpose.msra.mxu0 0
  %438 = vmatprep.subr.bf16.mxu0 0
  %439 = vmatpush1.bf16.xpose.msra.mxu0 0
  %440 = vmatprep.subr.bf16.mxu0 0
  %441 = vmatpush1.bf16.xpose.msra.mxu0 0
  %442 = vmatprep.subr.bf16.mxu0 0
  %443 = vmatpush1.bf16.xpose.msra.mxu0 0
  %444 = vmatprep.subr.bf16.mxu0 0
  %445 = vmatpush1.bf16.xpose.msra.mxu0 0
  %446 = vmatprep.subr.bf16.mxu0 0
  %447 = vmatpush1.bf16.xpose.msra.mxu0 0
  %448 = vmatprep.subr.bf16.mxu0 0
  %449 = vmatpush1.bf16.xpose.msra.mxu0 0
  %450 = vmatprep.subr.bf16.mxu0 0
  %451 = vmatpush1.bf16.xpose.msra.mxu0 0
  %452 = vmatprep.subr.bf16.mxu0 0
  %453 = vmatpush1.bf16.xpose.msra.mxu0 0
  %454 = vmatprep.subr.bf16.mxu0 0
  %455 = vmatpush1.bf16.xpose.msra.mxu0 0
  %456 = vmatprep.subr.bf16.mxu0 0
  %457 = vmatpush1.bf16.xpose.msra.mxu0 0
  %458 = vmatprep.subr.bf16.mxu0 0
  %459 = vmatpush1.bf16.xpose.msra.mxu0 0
  %460 = vmatprep.subr.bf16.mxu0 0
  %461 = vmatpush1.bf16.xpose.msra.mxu0 0
  %462 = vmatprep.mubr.bf16.mxu0 0
  %463 = vmatmul.mubr.bf16.gmra.mrb[0].mxu0 %v422
  %v464 = vpop.f32.mrb[0].mxu0
  %v465 = vadd.f32 %v418, %v464
  %v466 = vpop.f32.mrb[0].mxu0
  %v467 = vpop.f32.mrb[0].mxu0
  %v468 = vpop.f32.mrb[0].mxu0
  %469 = vdwg.mxu0
  %470 = vst.msk [vmem:[%s7] sm:$0xff] %vm171, %v465
  // Predicated region
  $region30: #{_forward_device.1} parent=0 // pred_check
    _
  $region31: #{_forward_device.1} parent=0 // pred_check_branch
    %472 = sbr.rel (0) target = $region33
  $region32: #{_forward_device.1} parent=0 // pred_region
    _
  $region33: #{_forward_device.1} parent=0 // pred_fallthru
    _
  // Predicated region
  $region34: #{_forward_device.1} parent=0 // pred_check
    _
  $region35: #{_forward_device.1} parent=0 // pred_check_branch
    %474 = sbr.rel (0) target = $region37
  $region36: #{_forward_device.1} parent=0 // pred_region
    _
  $region37: #{_forward_device.1} parent=0 // pred_fallthru
    _

</llo_original>
